<compile_context>
chip_gen: v5e
topology: v5e:2x2
jax: 0.10.0
libtpu: 0.0.40
codegen_flags: <defaults>
</compile_context>

<pallas_src>
import jax
import jax.numpy as jnp
from jax.experimental import pallas as pl
from jax.experimental.pallas import tpu as pltpu


def _sigmoid_f32(y):
    # sigmoid(y) = 1 / (1 + exp(-y)); exp and the approximate reciprocal both
    # run on the EUP slot, keeping the epilogue off the VALU.
    return pl.reciprocal(1.0 + jnp.exp(-y), approx=True)


def _generator_kernel_single_k(x_ref, w_ref, b_ref, o_ref):
    # Fast path: full contraction in one block -> no accumulator scratch,
    # no K-axis init/epilogue gating.
    y = jnp.dot(x_ref[...].astype(w_ref.dtype), w_ref[...],
                preferred_element_type=jnp.float32)
    y = y + b_ref[...].astype(jnp.float32)
    o_ref[...] = _sigmoid_f32(y).astype(o_ref.dtype)


def _generator_kernel_multi_k(x_ref, w_ref, b_ref, o_ref, acc_ref):
    # General path: K is tiled; f32 VMEM accumulator persists across the K axis.
    k = pl.program_id(2)

    @pl.when(k == 0)
    def _():
        acc_ref[...] = jnp.zeros_like(acc_ref)

    acc_ref[...] += jnp.dot(x_ref[...].astype(w_ref.dtype), w_ref[...],
                            preferred_element_type=jnp.float32)

    @pl.when(k == pl.num_programs(2) - 1)
    def _():
        y = acc_ref[...] + b_ref[...].astype(jnp.float32)
        o_ref[...] = _sigmoid_f32(y).astype(o_ref.dtype)


def _pick_tile(dim, preferred):
    """Largest preferred tile that evenly divides `dim`, else the full dim.

    Full-dim blocks always satisfy the (8,128) BlockSpec constraint."""
    for t in preferred:
        if dim % t == 0:
            return t
    return dim


def generator_forward(x, weight, bias, *, compute_dtype=jnp.bfloat16):
    """y = sigmoid(x @ weight.T + bias), matching nn.Linear + nn.Sigmoid.

    x:      (B, S) float32
    weight: (S, S) float32  (PyTorch layout: out_features x in_features)
    bias:   (S,)   float32
    """
    B, S = x.shape
    assert weight.shape == (S, S)
    assert bias.shape == (S,)

    # Parameter prep (in a real model this is done once at weight-load time
    # and amortized across calls): MXU-native (in, out) layout + bf16 stream.
    w_t = weight.T.astype(compute_dtype)      # (in_features, out_features)
    b2 = bias.reshape(1, S)                   # keep 2-D for TPU lane layout
    w_item = jnp.dtype(compute_dtype).itemsize

    # ---- tile selection -----------------------------------------------------
    tm = _pick_tile(B, (512, 256, 128))
    tn = _pick_tile(S, (512, 256, 128))
    # v7x megacore only pays when a "parallel" axis has >= 2 blocks.
    if (B // tm) * (S // tn) < 2:
        for t in (256, 128):
            if S % t == 0 and S // t >= 2:
                tn = t
                break
    # Single-K whenever the full contraction fits a modest VMEM block.
    if S <= 2048:
        tk = S
    else:
        tk = _pick_tile(S, (1024, 512, 256, 128))
    # TODO(synk): for huge S not divisible by 128 the full-dim fallback could
    # exceed VMEM (esp. v7x 64 MiB); a cdiv grid with padding/masking is the
    # proper fix there.

    n_m, n_n, n_k = B // tm, S // tn, S // tk

    # ---- VMEM budget --------------------------------------------------------
    w_bufs = 3 if n_k > 1 else 2              # Buffered(3) weight when K is tiled
    footprint = (2 * tm * tk * 4              # x tiles, f32, double-buffered
                 + w_bufs * tk * tn * w_item  # weight tiles
                 + 2 * tn * 4                 # bias tiles
                 + 2 * tm * tn * 4            # output tiles
                 + (tm * tn * 4 if n_k > 1 else 0))   # accumulator scratch
    vmem_limit = None
    if footprint > 12 * 1024 * 1024:          # near v5e's 16 MiB scoped default
        vmem_limit = min(int(1.5 * footprint) + (2 << 20), 48 << 20)

    # Advisory cost estimate, counting tile re-reads (weight re-read per row
    # block of the output, x re-read per column block).
    cost = pl.CostEstimate(
        flops=2 * B * S * S,
        transcendentals=B * S,
        bytes_accessed=(4 * B * S * n_n
                        + w_item * S * S * n_m
                        + 4 * S * n_m
                        + 4 * B * S),
    )

    if n_k == 1:
        grid_spec = pltpu.PrefetchScalarGridSpec(
            num_scalar_prefetch=0,
            grid=(n_m, n_n),
            in_specs=[
                pl.BlockSpec((tm, tk), lambda i, j: (i, 0)),   # x
                pl.BlockSpec((tk, tn), lambda i, j: (0, j)),   # weight (in, out)
                pl.BlockSpec((1, tn), lambda i, j: (0, j)),    # bias
            ],
            out_specs=pl.BlockSpec((tm, tn), lambda i, j: (i, j)),
        )
        kernel = _generator_kernel_single_k
        semantics = ("parallel", "parallel")
    else:
        grid_spec = pltpu.PrefetchScalarGridSpec(
            num_scalar_prefetch=0,
            grid=(n_m, n_n, n_k),
            in_specs=[
                pl.BlockSpec((tm, tk), lambda i, j, k: (i, k)),
                pl.BlockSpec((tk, tn), lambda i, j, k: (k, j),
                             pipeline_mode=pl.Buffered(3)),
                pl.BlockSpec((1, tn), lambda i, j, k: (0, j)),
            ],
            out_specs=pl.BlockSpec((tm, tn), lambda i, j, k: (i, j)),
            scratch_shapes=[pltpu.VMEM((tm, tn), jnp.float32)],
        )
        kernel = _generator_kernel_multi_k
        semantics = ("parallel", "parallel", "arbitrary")

    return pl.pallas_call(
        kernel,
        out_shape=jax.ShapeDtypeStruct((B, S), x.dtype),
        grid_spec=grid_spec,
        compiler_params=pltpu.CompilerParams(
            dimension_semantics=semantics,
            vmem_limit_bytes=vmem_limit,
        ),
        cost_estimate=cost,
    )(x, w_t, b2)


if __name__ == "__main__":
    # Small shapes consistent with the module: Generator(seq_length=128), batch=8.
    batch = 8
    seq_length = 128

    key = jax.random.PRNGKey(0)
    kx, kw, kb = jax.random.split(key, 3)

    # Deterministic synthetic parameters (PyTorch Linear layout: (out, in)).
    bound = 1.0 / (seq_length ** 0.5)
    weight = jax.random.uniform(
        kw, (seq_length, seq_length), jnp.float32, -bound, bound)
    bias = jax.random.uniform(kb, (seq_length,), jnp.float32, -bound, bound)
    x = jax.random.normal(kx, (batch, seq_length), jnp.float32)

    # bf16-weight fast path (default).
    out = generator_forward(x, weight, bias)
    out = jax.block_until_ready(out)

    # Reference in plain JAX (f32).
    ref = jax.nn.sigmoid(x @ weight.T + bias)
    assert out.shape == (batch, seq_length)
    # bf16 MXU operands + approximate EUP reciprocal -> loosened tolerance.
    assert jnp.allclose(out, ref, atol=2e-2, rtol=0.0)

    # Full-f32 path sanity check (tolerance covers the approx reciprocal only).
    out_f32 = generator_forward(x, weight, bias, compute_dtype=jnp.float32)
    out_f32 = jax.block_until_ready(out_f32)
    assert jnp.allclose(out_f32, ref, atol=5e-3, rtol=0.0)

    print("KERNEL_OK")
</pallas_src>

<mosaic_0001>
module attributes {stable_mosaic.version = 11 : i64} {
  func.func @_generator_kernel_single_k(%arg0: i32, %arg1: i32, %arg2: memref<8x128xf32, #tpu.memory_space<vmem>>, %arg3: memref<128x128xbf16, #tpu.memory_space<vmem>>, %arg4: memref<1x128xf32, #tpu.memory_space<vmem>>, %arg5: memref<8x128xf32, #tpu.memory_space<vmem>>) attributes {dimension_semantics = [#tpu.dimension_semantics<parallel>, #tpu.dimension_semantics<parallel>], iteration_bounds = array<i64: 1, 1>, scalar_prefetch = 0 : i64, scratch_operands = 0 : i64, tpu.core_type = #tpu.core_type<tc>, window_params = [{transform_indices = @transform_0, window_bounds = array<i64: 8, 128>}, {transform_indices = @transform_1, window_bounds = array<i64: 128, 128>}, {transform_indices = @transform_2, window_bounds = array<i64: 1, 128>}, {transform_indices = @transform_3, window_bounds = array<i64: 8, 128>}]} {
    %c0 = arith.constant 0 : index
    %c0_0 = arith.constant 0 : index
    %0 = vector.load %arg2[%c0, %c0_0] : memref<8x128xf32, #tpu.memory_space<vmem>>, vector<8x128xf32>
    %1 = arith.truncf %0 : vector<8x128xf32> to vector<8x128xbf16>
    %c0_1 = arith.constant 0 : index
    %c0_2 = arith.constant 0 : index
    %2 = vector.load %arg3[%c0_1, %c0_2] : memref<128x128xbf16, #tpu.memory_space<vmem>>, vector<128x128xbf16>
    %cst = arith.constant dense<0.000000e+00> : vector<8x128xf32>
    %3 = tpu.matmul %1, %2, %cst {dimension_numbers = #tpu.dot_dimension_numbers<[1], [0], [0], [1], [0, 0, 1, 1], [], []>} : vector<8x128xbf16>, vector<128x128xbf16>, vector<8x128xf32> -> vector<8x128xf32>
    %c0_3 = arith.constant 0 : index
    %c0_4 = arith.constant 0 : index
    %4 = vector.load %arg4[%c0_3, %c0_4] : memref<1x128xf32, #tpu.memory_space<vmem>>, vector<1x128xf32>
    %5 = vector.broadcast %4 : vector<1x128xf32> to vector<8x128xf32>
    %6 = arith.addf %3, %5 : vector<8x128xf32>
    %cst_5 = arith.constant 0.000000e+00 : f32
    %7 = vector.broadcast %cst_5 : f32 to vector<8x128xf32>
    %8 = arith.subf %7, %6 : vector<8x128xf32>
    %9 = math.exp %8 : vector<8x128xf32>
    %cst_6 = arith.constant 1.000000e+00 : f32
    %10 = vector.broadcast %cst_6 : f32 to vector<8x128xf32>
    %11 = arith.addf %10, %9 : vector<8x128xf32>
    %12 = tpu.reciprocal %11 {approx = true} : vector<8x128xf32> -> vector<8x128xf32>
    %c0_7 = arith.constant 0 : index
    %c0_8 = arith.constant 0 : index
    %13 = vector.load %arg5[%c0_7, %c0_8] : memref<8x128xf32, #tpu.memory_space<vmem>>, vector<8x128xf32>
    tpu.vector_store %arg5[%c0_7, %c0_8], %12 {strides = array<i32>} : memref<8x128xf32, #tpu.memory_space<vmem>>, vector<8x128xf32>,
    return
  }
  func.func @transform_0(%arg0: i32, %arg1: i32) -> (i32, i32) {
    %c0_i32 = arith.constant 0 : i32
    %c0_i32_0 = arith.constant 0 : i32
    return %arg0, %c0_i32 : i32, i32
  }
  func.func @transform_1(%arg0: i32, %arg1: i32) -> (i32, i32) {
    %c0_i32 = arith.constant 0 : i32
    %c0_i32_0 = arith.constant 0 : i32
    return %c0_i32, %arg1 : i32, i32
  }
  func.func @transform_2(%arg0: i32, %arg1: i32) -> (i32, i32) {
    %c0_i32 = arith.constant 0 : i32
    %c0_i32_0 = arith.constant 0 : i32
    return %c0_i32, %arg1 : i32, i32
  }
  func.func @transform_3(%arg0: i32, %arg1: i32) -> (i32, i32) {
    %c0_i32 = arith.constant 0 : i32
    return %arg0, %arg1 : i32, i32
  }
}

</mosaic_0001>

<llo_original>
// kernel: tpu_custom_call.1
$region0: #{tpu_custom_call.1}
  #allocation0 [shape = 'u32[]', space=smem, size = 0x4, offset = 0x4, fixed_abs, tag = 'smem constant byte address 0x4 - core index']
  #allocation1 [shape = 'u32[72,128]{1,0:T(1,128)}', space=vmem, size = 0x9000, scoped, tag = 'internal scratch']
  %s0 = inlined_call_operand.hbm [shape: f32[8,128], index: 0, kind: input, shape index: {}]
  %s1 = inlined_call_operand.hbm [shape: bf16[128,128], index: 1, kind: input, shape index: {}]
  %s2 = inlined_call_operand.vmem [shape: f32[1,128], index: 2, kind: input, shape index: {}]
  %s3 = inlined_call_operand.hbm [shape: f32[8,128], index: 3, kind: output, shape index: {}]
  %s4 = sld [smem:[#allocation0]]
  $region30: #{tpu_custom_call.1} parent=0
    _
  %s6 = ssub.s32 1, %s4
  %s7 = scalar_select 0, %s6, %s4
  $region1: #{tpu_custom_call.1} parent=0
    #allocation2 [shape = 'u8[4096]{0}', space=vmem, size = 0x1000, scoped, tag = 'input window, operand 0, single buffered']
    #allocation3 [shape = 's32[1]{0}', space=sflag, size = 0x4, scoped, tag = 'scoped memory for tpu_custom_call.1']
    #allocation4 [shape = 's32[1]{0}', space=sflag, size = 0x4, scoped, tag = 'scoped memory for tpu_custom_call.1']
    #allocation5 [shape = 'u8[32768]{0}', space=vmem, size = 0x8000, scoped, tag = 'input window, operand 1, single buffered']
    #allocation6 [shape = 's32[1]{0}', space=sflag, size = 0x4, scoped, tag = 'scoped memory for tpu_custom_call.1']
    #allocation7 [shape = 'u8[4096]{0}', space=vmem, size = 0x1000, scoped, tag = 'output window, operand 0, single buffered']
    %8 = vsyncpa [#allocation3], 0
    %9 = vsyncpa [#allocation6], 0
    %10 = vsyncpa [#allocation4], 0
    // Predicated region
    $region2: #{tpu_custom_call.1} parent=1 // pred_check
      _
    $region3: #{tpu_custom_call.1} parent=1 // pred_check_branch
      %12 = sbr.rel (0) target = $region5
    $region4: #{tpu_custom_call.1} parent=1 // pred_region
      %14 = vsyncadd [#allocation3], 0
      %s16 = sshll.u32 %s0, 4
      %s17 = int_to_ptr.hbm [resolvable:$true] %s16
      %s18 = sshll.u32 [#allocation2], 4
      %s19 = int_to_ptr.vmem [resolvable:$true] %s18
      %21 = dma.hbm_to_vmem [thread:$0]  %s17, 128, %s19, [#allocation3]
    $region5: #{tpu_custom_call.1} parent=1 // pred_fallthru
      _
    // Predicated region
    $region6: #{tpu_custom_call.1} parent=1 // pred_check
      _
    $region7: #{tpu_custom_call.1} parent=1 // pred_check_branch
      %23 = sbr.rel (0) target = $region9
    $region8: #{tpu_custom_call.1} parent=1 // pred_region
      %25 = vsyncadd [#allocation6], 0
      %s26 = sshll.u32 %s1, 4
      %s27 = int_to_ptr.hbm [resolvable:$true] %s26
      %s28 = sshll.u32 [#allocation5], 4
      %s29 = int_to_ptr.vmem [resolvable:$true] %s28
      %34 = dma.hbm_to_vmem [thread:$0]  %s27, 1024, %s29, [#allocation6], 64, 64, 4
    $region9: #{tpu_custom_call.1} parent=1 // pred_fallthru
      _
    // Predicated region
    $region10: #{tpu_custom_call.1} parent=1 // pred_check
      _
    $region11: #{tpu_custom_call.1} parent=1 // pred_check_branch
      %36 = sbr.rel (0) target = $region13
    $region12: #{tpu_custom_call.1} parent=1 // pred_region
      _
    $region13: #{tpu_custom_call.1} parent=1 // pred_fallthru
      _
    // Predicated region
    $region14: #{tpu_custom_call.1} parent=1 // pred_check
      _
    $region15: #{tpu_custom_call.1} parent=1 // pred_check_branch
      %38 = sbr.rel (0) target = $region17
    $region16: #{tpu_custom_call.1} parent=1 // pred_region
      %40 = dma.done [#allocation3], 128
    $region17: #{tpu_custom_call.1} parent=1 // pred_fallthru
      _
    // Predicated region
    $region18: #{tpu_custom_call.1} parent=1 // pred_check
      _
    $region19: #{tpu_custom_call.1} parent=1 // pred_check_branch
      %42 = sbr.rel (0) target = $region21
    $region20: #{tpu_custom_call.1} parent=1 // pred_region
      %44 = dma.done [#allocation6], 1024
    $region21: #{tpu_custom_call.1} parent=1 // pred_fallthru
      _
    %v45 = vld [vmem:[#allocation2] sm:$0xff]
    %v46 = vpack.c.bf16 %v45, %v45
    %v47 = vld [vmem:[#allocation5] sm:$0xf]
    %v48 = vld [vmem:[#allocation5 + $0x4] sm:$0xf]
    %v49 = vld [vmem:[#allocation5 + $0x8] sm:$0xf]
    %v50 = vld [vmem:[#allocation5 + $0xc] sm:$0xf]
    %v51 = vld [vmem:[#allocation5 + $0x10] sm:$0xf]
    %v52 = vld [vmem:[#allocation5 + $0x14] sm:$0xf]
    %v53 = vld [vmem:[#allocation5 + $0x18] sm:$0xf]
    %v54 = vld [vmem:[#allocation5 + $0x1c] sm:$0xf]
    %v55 = vld [vmem:[#allocation5 + $0x20] sm:$0xf]
    %v56 = vld [vmem:[#allocation5 + $0x24] sm:$0xf]
    %v57 = vld [vmem:[#allocation5 + $0x28] sm:$0xf]
    %v58 = vld [vmem:[#allocation5 + $0x2c] sm:$0xf]
    %v59 = vld [vmem:[#allocation5 + $0x30] sm:$0xf]
    %v60 = vld [vmem:[#allocation5 + $0x34] sm:$0xf]
    %v61 = vld [vmem:[#allocation5 + $0x38] sm:$0xf]
    %v62 = vld [vmem:[#allocation5 + $0x3c] sm:$0xf]
    %v63 = vld [vmem:[%s2] sm:$0x1]
    %v65 = vperm.slane %v63, 0
    %v83 = vunpack.c.l.b16 %v47
    %v84 = vunpack.c.l.b16 %v48
    %v85 = vunpack.c.l.b16 %v49
    %v86 = vunpack.c.l.b16 %v50
    %v87 = vunpack.c.l.b16 %v51
    %v88 = vunpack.c.l.b16 %v52
    %v89 = vunpack.c.l.b16 %v53
    %v90 = vunpack.c.l.b16 %v54
    %v91 = vunpack.c.l.b16 %v55
    %v92 = vunpack.c.l.b16 %v56
    %v93 = vunpack.c.l.b16 %v57
    %v94 = vunpack.c.l.b16 %v58
    %v95 = vunpack.c.l.b16 %v59
    %v96 = vunpack.c.l.b16 %v60
    %v97 = vunpack.c.l.b16 %v61
    %v98 = vunpack.c.l.b16 %v62
    %v99 = vpack.c.b16 %v84, %v83
    %v100 = vpack.c.b16 %v86, %v85
    %v101 = vpack.c.b16 %v88, %v87
    %v102 = vpack.c.b16 %v90, %v89
    %v103 = vpack.c.b16 %v92, %v91
    %v104 = vpack.c.b16 %v94, %v93
    %v105 = vpack.c.b16 %v96, %v95
    %v106 = vpack.c.b16 %v98, %v97
    %115 = vmatpush.bf16.msra.mxu0 %v106
    %116 = vmatpush.bf16.msra.mxu0 %v105
    %117 = vmatpush.bf16.msra.mxu0 %v104
    %118 = vmatpush.bf16.msra.mxu0 %v103
    %119 = vmatpush.bf16.msra.mxu0 %v102
    %120 = vmatpush.bf16.msra.mxu0 %v101
    %121 = vmatpush.bf16.msra.mxu0 %v100
    %122 = vmatpush.bf16.msra.mxu0 %v99
    %123 = vmatmul.bf16.gmra.mxu0 %v46
    %v124 = vpop.f32.mrf.mxu0
    %v125 = vadd.f32 %v65, %v124
    %v126 = vpop.f32.mrf.mxu0
    %127 = vdwg.mxu0
    %v128 = vsub.f32 0.0, %v125
    %v129 = vmul.f32 %v128, 1.442695
    %v130 = vpow.pop %v129
    %v131 = vadd.f32 %v130, 1.0
    %v132 = vrcp.pop %v131
    %133 = vst [vmem:[#allocation7] sm:$0xff] %v132
    // Predicated region
    $region22: #{tpu_custom_call.1} parent=1 // pred_check
      _
    $region23: #{tpu_custom_call.1} parent=1 // pred_check_branch
      %135 = sbr.rel (0) target = $region25
    $region24: #{tpu_custom_call.1} parent=1 // pred_region
      %137 = vsyncadd [#allocation4], 0
      %s139 = sshll.u32 [#allocation7], 4
      %s140 = int_to_ptr.vmem [resolvable:$true] %s139
      %s141 = sshll.u32 %s3, 4
      %s142 = int_to_ptr.hbm [resolvable:$true] %s141
      %144 = dma.vmem_to_hbm [thread:$0]  %s140, 128, %s142, [#allocation4]
    $region25: #{tpu_custom_call.1} parent=1 // pred_fallthru
      _
    // Predicated region
    $region26: #{tpu_custom_call.1} parent=1 // pred_check
      _
    $region27: #{tpu_custom_call.1} parent=1 // pred_check_branch
      %146 = sbr.rel (0) target = $region29
    $region28: #{tpu_custom_call.1} parent=1 // pred_region
      %148 = dma.done [#allocation4], 128
    $region29: #{tpu_custom_call.1} parent=1 // pred_fallthru
      _
    %149 = vsyncpa [#allocation3], 1
    %150 = vsyncpa [#allocation6], 1
    %151 = vsyncpa [#allocation4], 1

</llo_original>
